<compile_context>
chip_gen: v5e
topology: v5e:2x2
jax: 0.10.0
libtpu: 0.0.40
codegen_flags: <defaults>
</compile_context>

<pallas_src>
import math
from functools import partial

import jax
import jax.numpy as jnp
from jax import lax
from jax.experimental import pallas as pl
from jax.experimental.pallas import tpu as pltpu


def _pick_q_tile(n):
    # Largest tile that divides N and keeps the double-buffered f32 bias +
    # bf16 attention tiles under ~24 MiB per step (v7x-safe); block == full
    # array dim is always legal as a fallback.
    budget = 24 * 2**20
    divisors = [t for t in (512, 256, 128, 64, 32, 16, 8) if n % t == 0]
    if not divisors:
        return n
    for t in divisors:                     # largest first
        if 2 * t * n * (4 + 2) <= budget:  # 2 bufs * (f32 bias + bf16 attn)
            return t
    return divisors[-1]


def _vmem_limit_bytes():
    # Derive from the actual chip (64 MiB/TC on v7x vs 128 MiB on v5e/v6e) and
    # leave ~25% headroom for compiler scratch instead of a hard clamp.
    try:
        cap = pltpu.get_tpu_info().vmem_capacity_bytes
    except Exception:
        cap = 64 * 2**20
    return int(cap * 3 // 4)


def _qkv_kernel(x_ref, w_ref, qkv_ref):
    # (TQ, C) @ (C, 3C) -> (TQ, 3C), f32 accumulation, stored bf16 lane-dense.
    qkv_ref[...] = jnp.dot(
        x_ref[...], w_ref[...], preferred_element_type=jnp.float32
    ).astype(qkv_ref.dtype)


def _attn_kernel(q_ref, k_ref, v_ref, bias_ref, attn_ref, ctx_ref):
    # logits = (q * scale) @ k^T + bias  (scale pre-folded into W_q).
    scores = lax.dot_general(
        q_ref[0], k_ref[0],
        dimension_numbers=(((1,), (1,)), ((), ())),   # contract Hd, no transpose op
        preferred_element_type=jnp.float32)
    scores = scores + bias_ref[0]

    # Softmax in f32.  Exact reciprocal so the *returned* rows sum to 1.
    m = jnp.max(scores, axis=-1, keepdims=True)
    p = jnp.exp(scores - m)
    denom = jnp.sum(p, axis=-1, keepdims=True)
    probs = p * pl.reciprocal(denom, approx=False)

    attn_ref[0] = probs.astype(attn_ref.dtype)        # bf16 stream out

    # Context: (TQ, N) @ (N, Hd) -> (TQ, Hd); bf16 for the proj kernel.
    ctx = jnp.dot(probs.astype(jnp.bfloat16), v_ref[0],
                  preferred_element_type=jnp.float32)
    ctx_ref[0] = ctx.astype(ctx_ref.dtype)


def _proj_kernel(ctx_ref, w_ref, b_ref, out_ref):
    # Single full-depth K=C contraction (heads already concatenated).
    out_ref[...] = jnp.dot(
        ctx_ref[...], w_ref[...], preferred_element_type=jnp.float32
    ) + b_ref[...]


def attention_forward(x, w_qkv_t, w_proj_t, b_proj, bias, num_heads):
    """x: (1, N, C); w_qkv_t: (C, 3C); w_proj_t: (C, C); b_proj: (C,);
    bias: (1, H, N, N) f32.  Returns (out (1,N,C) f32, attention (1,H,N,N) bf16)."""
    B, N, C = x.shape
    assert B == 1, "forward's q.view(1, N, 1, -1) implies batch size 1"
    H = num_heads
    Hd = C // H
    TQ = _pick_q_tile(N)
    nq = N // TQ
    scale = 1.0 / math.sqrt(Hd)

    # ---- one-time layout / dtype prep (plain XLA, outside the kernels) ----
    # Fold the softmax scale into W_q; cast activations & weights to bf16 once.
    w_qkv_scaled = jnp.concatenate(
        [w_qkv_t[:, :C] * scale, w_qkv_t[:, C:]], axis=1).astype(jnp.bfloat16)
    x2 = x[0].astype(jnp.bfloat16)                       # (N, C)
    w_p = w_proj_t.astype(jnp.bfloat16)                  # (C, C)
    b_p = b_proj.reshape(1, C).astype(jnp.float32)

    vmem_limit = _vmem_limit_bytes()

    # ---- kernel 0: fused QKV projection (lane-dense, full MXU width) ----
    qkv = pl.pallas_call(
        _qkv_kernel,
        grid_spec=pltpu.PrefetchScalarGridSpec(
            num_scalar_prefetch=0,
            grid=(nq,),
            in_specs=[
                pl.BlockSpec((TQ, C), lambda i: (i, 0)),       # x tile
                pl.BlockSpec((C, 3 * C), lambda i: (0, 0)),    # W_qkv (scaled)
            ],
            out_specs=pl.BlockSpec((TQ, 3 * C), lambda i: (i, 0)),
        ),
        out_shape=jax.ShapeDtypeStruct((N, 3 * C), jnp.bfloat16),
        compiler_params=pltpu.CompilerParams(
            dimension_semantics=("parallel",),
            vmem_limit_bytes=vmem_limit),
    )(x2, w_qkv_scaled)

    # Layout plumbing: per-head lane-dense slabs (3, H, N, Hd), bf16 (cheap).
    qkv_heads = qkv.reshape(N, 3, H, Hd).transpose(1, 2, 0, 3)
    q_h, k_h, v_h = qkv_heads[0], qkv_heads[1], qkv_heads[2]

    # ---- kernel 1: attention (per head, per q-tile) ----
    attn, ctx = pl.pallas_call(
        _attn_kernel,
        grid_spec=pltpu.PrefetchScalarGridSpec(
            num_scalar_prefetch=0,
            grid=(H, nq),
            in_specs=[
                pl.BlockSpec((1, TQ, Hd), lambda h, j: (h, j, 0)),  # Q tile
                pl.BlockSpec((1, N, Hd), lambda h, j: (h, 0, 0)),   # K_h slab
                pl.BlockSpec((1, N, Hd), lambda h, j: (h, 0, 0)),   # V_h slab
                pl.BlockSpec((1, TQ, N), lambda h, j: (h, j, 0)),   # bias tile
            ],
            out_specs=(
                pl.BlockSpec((1, TQ, N), lambda h, j: (h, j, 0)),   # attn tile
                pl.BlockSpec((1, TQ, Hd), lambda h, j: (h, j, 0)),  # ctx tile
            ),
        ),
        out_shape=(jax.ShapeDtypeStruct((H, N, N), jnp.bfloat16),
                   jax.ShapeDtypeStruct((H, N, Hd), jnp.bfloat16)),
        compiler_params=pltpu.CompilerParams(
            dimension_semantics=("parallel", "arbitrary"),
            vmem_limit_bytes=vmem_limit),
    )(q_h, k_h, v_h, bias[0])

    # Layout plumbing: concat heads -> (N, C) bf16 (~N*C*2 bytes, negligible).
    ctx_nc = ctx.transpose(1, 0, 2).reshape(N, C)

    # ---- kernel 2: output projection, single K=C contraction ----
    out = pl.pallas_call(
        _proj_kernel,
        grid_spec=pltpu.PrefetchScalarGridSpec(
            num_scalar_prefetch=0,
            grid=(nq,),
            in_specs=[
                pl.BlockSpec((TQ, C), lambda i: (i, 0)),       # ctx tile
                pl.BlockSpec((C, C), lambda i: (0, 0)),        # W_proj
                pl.BlockSpec((1, C), lambda i: (0, 0)),        # b_proj
            ],
            out_specs=pl.BlockSpec((TQ, C), lambda i: (i, 0)),
        ),
        out_shape=jax.ShapeDtypeStruct((N, C), jnp.float32),
        compiler_params=pltpu.CompilerParams(
            dimension_semantics=("parallel",),
            vmem_limit_bytes=vmem_limit),
    )(ctx_nc, w_p, b_p)

    # Attention map is returned bf16 (perf review: halves the dominant HBM
    # write); cast at the caller if strict f32 is required.
    return out[None], attn[None]


def reference_forward(x, w_qkv_t, w_proj_t, b_proj, bias, num_heads):
    B, N, C = x.shape
    Hd = C // num_heads
    qkv = x @ w_qkv_t                                                  # (B, N, 3C)
    q = qkv[..., :C].reshape(B, N, num_heads, Hd)
    k = qkv[..., C:2 * C].reshape(B, N, num_heads, Hd)
    v = qkv[..., 2 * C:].reshape(B, N, num_heads, Hd)
    logits = jnp.einsum('bnhd,bmhd->bhnm', q, k) / math.sqrt(Hd) + bias
    probs = jax.nn.softmax(logits, axis=-1)
    ctx = jnp.einsum('bhnm,bmhd->bnhd', probs, v).reshape(B, N, C)
    out = ctx @ w_proj_t + b_proj
    return out, probs


if __name__ == "__main__":
    B, N, C, H = 1, 8, 32, 4   # forward requires B == 1

    key = jax.random.PRNGKey(0)
    kx, kqkv, kproj, kb, kbias = jax.random.split(key, 5)

    x = jax.random.normal(kx, (B, N, C), dtype=jnp.float32)
    # PyTorch stores Linear weight as (out, in); we keep the (in, out) transpose.
    w_qkv_t = 0.05 * jax.random.normal(kqkv, (C, 3 * C), dtype=jnp.float32)
    w_proj_t = 0.05 * jax.random.normal(kproj, (C, C), dtype=jnp.float32)
    b_proj = 0.05 * jax.random.normal(kb, (C,), dtype=jnp.float32)
    bias = 0.1 * jax.random.normal(kbias, (1, H, N, N), dtype=jnp.float32)

    out, attn = attention_forward(x, w_qkv_t, w_proj_t, b_proj, bias, H)
    out, attn = jax.block_until_ready((out, attn))

    ref_out, ref_attn = reference_forward(x, w_qkv_t, w_proj_t, b_proj, bias, H)
    assert out.shape == (B, N, C) and attn.shape == (B, H, N, N)
    # bf16 MXU operands / bf16 attention stream -> relaxed tolerance vs f32 ref.
    assert jnp.allclose(out, ref_out, atol=2e-2, rtol=2e-2), \
        float(jnp.max(jnp.abs(out - ref_out)))
    assert jnp.allclose(attn.astype(jnp.float32), ref_attn, atol=2e-2, rtol=2e-2), \
        float(jnp.max(jnp.abs(attn.astype(jnp.float32) - ref_attn)))

    print("KERNEL_OK")
</pallas_src>

<mosaic_0001>
module attributes {stable_mosaic.version = 11 : i64} {
  func.func @_qkv_kernel(%arg0: i32, %arg1: memref<8x32xbf16, #tpu.memory_space<vmem>>, %arg2: memref<32x96xbf16, #tpu.memory_space<vmem>>, %arg3: memref<8x96xbf16, #tpu.memory_space<vmem>>) attributes {dimension_semantics = [#tpu.dimension_semantics<parallel>], iteration_bounds = array<i64: 1>, scalar_prefetch = 0 : i64, scratch_operands = 0 : i64, tpu.core_type = #tpu.core_type<tc>, window_params = [{transform_indices = @transform_0, window_bounds = array<i64: 8, 32>}, {pipeline_mode = #tpu.pipeline_mode<synchronous>, transform_indices = @transform_1, window_bounds = array<i64: 32, 96>}, {transform_indices = @transform_2, window_bounds = array<i64: 8, 96>}]} {
    %c0 = arith.constant 0 : index
    %c0_0 = arith.constant 0 : index
    %0 = vector.load %arg1[%c0, %c0_0] : memref<8x32xbf16, #tpu.memory_space<vmem>>, vector<8x32xbf16>
    %c0_1 = arith.constant 0 : index
    %c0_2 = arith.constant 0 : index
    %1 = vector.load %arg2[%c0_1, %c0_2] : memref<32x96xbf16, #tpu.memory_space<vmem>>, vector<32x96xbf16>
    %cst = arith.constant dense<0.000000e+00> : vector<8x96xf32>
    %2 = tpu.matmul %0, %1, %cst {dimension_numbers = #tpu.dot_dimension_numbers<[1], [0], [0], [1], [0, 0, 1, 1], [], []>} : vector<8x32xbf16>, vector<32x96xbf16>, vector<8x96xf32> -> vector<8x96xf32>
    %3 = arith.truncf %2 : vector<8x96xf32> to vector<8x96xbf16>
    %c0_3 = arith.constant 0 : index
    %c0_4 = arith.constant 0 : index
    %4 = vector.load %arg3[%c0_3, %c0_4] : memref<8x96xbf16, #tpu.memory_space<vmem>>, vector<8x96xbf16>
    tpu.vector_store %arg3[%c0_3, %c0_4], %3 {strides = array<i32>} : memref<8x96xbf16, #tpu.memory_space<vmem>>, vector<8x96xbf16>,
    return
  }
  func.func @transform_0(%arg0: i32) -> (i32, i32) {
    %c0_i32 = arith.constant 0 : i32
    %c0_i32_0 = arith.constant 0 : i32
    return %arg0, %c0_i32 : i32, i32
  }
  func.func @transform_1(%arg0: i32) -> (i32, i32) {
    %c0_i32 = arith.constant 0 : i32
    %c0_i32_0 = arith.constant 0 : i32
    %c0_i32_1 = arith.constant 0 : i32
    return %c0_i32, %c0_i32_0 : i32, i32
  }
  func.func @transform_2(%arg0: i32) -> (i32, i32) {
    %c0_i32 = arith.constant 0 : i32
    %c0_i32_0 = arith.constant 0 : i32
    return %arg0, %c0_i32 : i32, i32
  }
}

</mosaic_0001>

<llo_original>
// kernel: tpu_custom_call.1
$region0: #{tpu_custom_call.1}
  #allocation0 [shape = 'u32[]', space=smem, size = 0x4, offset = 0x4, fixed_abs, tag = 'smem constant byte address 0x4 - core index']
  #allocation1 [shape = 'u32[72,128]{1,0:T(1,128)}', space=vmem, size = 0x9000, scoped, tag = 'internal scratch']
  %s0 = inlined_call_operand.hbm [shape: bf16[8,32], index: 0, kind: input, shape index: {}]
  %s1 = inlined_call_operand.hbm [shape: bf16[32,96], index: 1, kind: input, shape index: {}]
  %s2 = inlined_call_operand.hbm [shape: bf16[8,96], index: 2, kind: output, shape index: {}]
  %s3 = sld [smem:[#allocation0]]
  $region26: #{tpu_custom_call.1} parent=0
    _
  %s5 = ssub.s32 1, %s3
  %s6 = scalar_select 0, %s5, %s3
  $region1: #{tpu_custom_call.1} parent=0
    #allocation2 [shape = 'u8[2048]{0}', space=vmem, size = 0x800, scoped, tag = 'input window, operand 0, single buffered']
    #allocation3 [shape = 's32[1]{0}', space=sflag, size = 0x4, scoped, tag = 'scoped memory for tpu_custom_call.1']
    #allocation4 [shape = 's32[1]{0}', space=sflag, size = 0x4, scoped, tag = 'scoped memory for tpu_custom_call.1']
    #allocation5 [shape = 'u8[8192]{0}', space=vmem, size = 0x2000, scoped, tag = 'input window, operand 1, single buffered']
    #allocation6 [shape = 's32[1]{0}', space=sflag, size = 0x4, scoped, tag = 'scoped memory for tpu_custom_call.1']
    #allocation7 [shape = 'u8[2048]{0}', space=vmem, size = 0x800, scoped, tag = 'output window, operand 0, single buffered']
    %7 = vsyncpa [#allocation3], 0
    %8 = vsyncpa [#allocation6], 0
    %9 = vsyncpa [#allocation4], 0
    // Predicated region
    $region2: #{tpu_custom_call.1} parent=1 // pred_check
      _
    $region3: #{tpu_custom_call.1} parent=1 // pred_check_branch
      %11 = sbr.rel (0) target = $region5
    $region4: #{tpu_custom_call.1} parent=1 // pred_region
      %13 = vsyncadd [#allocation3], 0
      %s15 = sshll.u32 %s0, 4
      %s16 = int_to_ptr.hbm [resolvable:$true] %s15
      %s17 = sshll.u32 [#allocation2], 4
      %s18 = int_to_ptr.vmem [resolvable:$true] %s17
      %20 = dma.hbm_to_vmem [thread:$0]  %s16, 64, %s18, [#allocation3]
    $region5: #{tpu_custom_call.1} parent=1 // pred_fallthru
      _
    // Predicated region
    $region6: #{tpu_custom_call.1} parent=1 // pred_check
      _
    $region7: #{tpu_custom_call.1} parent=1 // pred_check_branch
      %22 = sbr.rel (0) target = $region9
    $region8: #{tpu_custom_call.1} parent=1 // pred_region
      %24 = vsyncadd [#allocation6], 0
      %s25 = sshll.u32 %s1, 4
      %s26 = int_to_ptr.hbm [resolvable:$true] %s25
      %s27 = sshll.u32 [#allocation5], 4
      %s28 = int_to_ptr.vmem [resolvable:$true] %s27
      %33 = dma.hbm_to_vmem [thread:$0]  %s26, 256, %s28, [#allocation6], 64, 64, 4
    $region9: #{tpu_custom_call.1} parent=1 // pred_fallthru
      _
    // Predicated region
    $region10: #{tpu_custom_call.1} parent=1 // pred_check
      _
    $region11: #{tpu_custom_call.1} parent=1 // pred_check_branch
      %35 = sbr.rel (0) target = $region13
    $region12: #{tpu_custom_call.1} parent=1 // pred_region
      %37 = dma.done [#allocation3], 64
    $region13: #{tpu_custom_call.1} parent=1 // pred_fallthru
      _
    // Predicated region
    $region14: #{tpu_custom_call.1} parent=1 // pred_check
      _
    $region15: #{tpu_custom_call.1} parent=1 // pred_check_branch
      %39 = sbr.rel (0) target = $region17
    $region16: #{tpu_custom_call.1} parent=1 // pred_region
      %41 = dma.done [#allocation6], 256
    $region17: #{tpu_custom_call.1} parent=1 // pred_fallthru
      _
    %v43 = vld [vmem:[#allocation2] sm:$0xf]
    %v44 = vld [vmem:[#allocation5] sm:$0xf]
    %v45 = vld [vmem:[#allocation5 + $0x4] sm:$0xf]
    %v46 = vld [vmem:[#allocation5 + $0x8] sm:$0xf]
    %v47 = vld [vmem:[#allocation5 + $0xc] sm:$0xf]
    %v52 = vunpack.c.l.b16 %v44
    %v53 = vunpack.c.l.b16 %v45
    %v54 = vunpack.c.l.b16 %v46
    %v55 = vunpack.c.l.b16 %v47
    %v56 = vpack.c.b16 %v53, %v52
    %v57 = vpack.c.b16 %v55, %v54
    %vm60 = vcmask 261120
    %v62 = vsel %vm60, %v43, 0
    %64 = vmatpush.bf16.msra.mxu0 0
    %65 = vmatpush.bf16.msra.mxu0 0
    %66 = vmatpush.bf16.msra.mxu0 0
    %67 = vmatpush.bf16.msra.mxu0 0
    %68 = vmatpush.bf16.msra.mxu0 0
    %69 = vmatpush.bf16.msra.mxu0 0
    %70 = vmatpush.bf16.msra.mxu0 %v57
    %71 = vmatpush.bf16.msra.mxu0 %v56
    %72 = vmatmul.bf16.gmra.mxu0 %v62
    %v73 = vpop.f32.mrf.mxu0
    %v74 = vadd.f32 0.0, %v73
    %v75 = vpop.f32.mrf.mxu0
    %76 = vdwg.mxu0
    %v77 = vpack.c.bf16 %v74, %v74
    %vm78 = vcmask 781312
    %79 = vst.msk [vmem:[#allocation7] sm:$0xf] %vm78, %v77
    // Predicated region
    $region18: #{tpu_custom_call.1} parent=1 // pred_check
      _
    $region19: #{tpu_custom_call.1} parent=1 // pred_check_branch
      %81 = sbr.rel (0) target = $region21
    $region20: #{tpu_custom_call.1} parent=1 // pred_region
      %83 = vsyncadd [#allocation4], 0
      %s85 = sshll.u32 [#allocation7], 4
      %s86 = int_to_ptr.vmem [resolvable:$true] %s85
      %s87 = sshll.u32 %s2, 4
      %s88 = int_to_ptr.hbm [resolvable:$true] %s87
      %90 = dma.vmem_to_hbm [thread:$0]  %s86, 64, %s88, [#allocation4]
    $region21: #{tpu_custom_call.1} parent=1 // pred_fallthru
      _
    // Predicated region
    $region22: #{tpu_custom_call.1} parent=1 // pred_check
      _
    $region23: #{tpu_custom_call.1} parent=1 // pred_check_branch
      %92 = sbr.rel (0) target = $region25
    $region24: #{tpu_custom_call.1} parent=1 // pred_region
      %94 = dma.done [#allocation4], 64
    $region25: #{tpu_custom_call.1} parent=1 // pred_fallthru
      _
    %95 = vsyncpa [#allocation3], 1
    %96 = vsyncpa [#allocation6], 1
    %97 = vsyncpa [#allocation4], 1

</llo_original>
